<compile_context>
chip_gen: v7x
topology: tpu7x:2x2x1
jax: 0.10.0
libtpu: 0.0.40
codegen_flags: <defaults>
</compile_context>

<pallas_src>
import jax
import jax.numpy as jnp
from jax.experimental import pallas as pl
from jax.experimental.pallas import tpu as pltpu

_BN_EPS = 1e-5
# ~0.5 MiB of x per grid step.  Live f32 temporaries per step are ~15x the x tile
# (x, 9x stacked-tap operand, h1, h2, SE maps, out) plus double-buffered I/O, so the
# per-step footprint stays well under the explicit 32 MiB VMEM limit on all generations
# (v7x only has 64 MiB physical VMEM per TensorCore).
_TILE_TARGET_BYTES = 512 * 1024

_ROLL_LIKE_JNP = None


def _roll_is_like_jnp():
    """pltpu.roll follows jnp.roll semantics; probe once on-device to be version-proof."""
    global _ROLL_LIKE_JNP
    if _ROLL_LIKE_JNP is None:
        def probe(x_ref, o_ref):
            o_ref[...] = pltpu.roll(x_ref[...], shift=1, axis=1)

        x = jnp.arange(8 * 128, dtype=jnp.float32).reshape(8, 128)
        got = pl.pallas_call(
            probe, out_shape=jax.ShapeDtypeStruct((8, 128), jnp.float32))(x)
        _ROLL_LIKE_JNP = bool(jnp.array_equal(got, jnp.roll(x, 1, axis=1)))
    return _ROLL_LIKE_JNP


def fold_residual_block_params(p, eps=_BN_EPS):
    """One-time (init-time) prep: fold eval-mode BN into the convs and lay each conv's
    weights out as a (C, 9C) stacked-tap matrix so the conv is a single MXU matmul."""
    c = p["conv1_w"].shape[0]

    def fold_conv_bn(w, b, gamma, beta, mean, var):
        s = gamma * jax.lax.rsqrt(var + eps)
        w_eff = w * s[:, None, None, None]                       # (O, I, 3, 3)
        b_eff = s * (b - mean) + beta                            # (O,)
        # Stacked layout: W[o, (dy*3+dx)*C + i] = w_eff[o, i, dy, dx]; matches the
        # in-kernel tap stacking order (tap k occupies rows k*C .. k*C+C-1).
        w_stacked = jnp.transpose(w_eff, (0, 2, 3, 1)).reshape(c, 9 * c)
        return w_stacked, b_eff.reshape(c, 1)

    w1, b1 = fold_conv_bn(p["conv1_w"], p["conv1_b"], p["bn1_gamma"],
                          p["bn1_beta"], p["bn1_mean"], p["bn1_var"])
    w2, b2 = fold_conv_bn(p["conv2_w"], p["conv2_b"], p["bn2_gamma"],
                          p["bn2_beta"], p["bn2_mean"], p["bn2_var"])
    # SE shift/scale halves stay fused as a single (2C, C) matrix -> one dot in-kernel.
    return dict(w1=w1, b1=b1, w2=w2, b2=b2,
                w_se=p["se_w"], b_se=p["se_b"].reshape(2 * c, 1))


def _make_kernel(c, tb, h, w, shifts):
    hw = h * w
    L = tb * hw
    inv_hw = 1.0 / float(hw)

    def kernel(x_ref, w1_ref, b1_ref, w2_ref, b2_ref, wse_ref, bse_ref, o_ref):
        x = x_ref[...].astype(jnp.float32)                       # (C, L)

        # ---- masks generated in-kernel from iota (no HBM mask traffic) ---------------
        lane = jax.lax.broadcasted_iota(jnp.int32, (1, L), 1)
        pos = lane % hw                                          # position within image
        yy, xx = pos // w, pos % w
        tap_masks = []
        for k in range(9):
            dy, dx = k // 3, k % 3
            if dy == 1 and dx == 1:
                tap_masks.append(None)                           # center tap: in-bounds
            else:
                valid = ((yy + (dy - 1) >= 0) & (yy + (dy - 1) < h) &
                         (xx + (dx - 1) >= 0) & (xx + (dx - 1) < w))
                tap_masks.append(valid.astype(jnp.float32))      # (1, L)
        # Batch-segment one-hot masks for SE pooling / broadcast (both orientations so
        # neither matmul needs an in-kernel transpose).
        seg = jax.lax.broadcasted_iota(jnp.int32, (tb, L), 1) // hw
        row = jax.lax.broadcasted_iota(jnp.int32, (tb, L), 0)
        bmask = (seg == row).astype(jnp.float32)                 # (tb, L)
        seg_t = jax.lax.broadcasted_iota(jnp.int32, (L, tb), 0) // hw
        col_t = jax.lax.broadcasted_iota(jnp.int32, (L, tb), 1)
        bmask_t = (seg_t == col_t).astype(jnp.float32)           # (L, tb)

        # ---- 3x3 conv (+ folded BN) as ONE matmul: (C, 9C) @ (9C, L) -----------------
        def conv3x3_bn(inp, w_ref, b_ref):
            taps = []
            for k, shift in enumerate(shifts):
                t = inp if shift == 0 else pltpu.roll(inp, shift=shift, axis=1)
                m = tap_masks[k]
                taps.append(t if m is None else t * m)           # zero out-of-image taps
            stacked = jnp.concatenate(taps, axis=0)              # (9C, L)
            return jnp.dot(w_ref[...], stacked,
                           preferred_element_type=jnp.float32) + b_ref[...]

        h1 = jnp.maximum(conv3x3_bn(x, w1_ref, b1_ref), 0.0)     # ConvLayer: conv+BN+ReLU
        h2 = conv3x3_bn(h1, w2_ref, b2_ref)                      # conv2 + norm2

        # ---- SqueezeExcitation on a (C, tb) pooled matrix -----------------------------
        pooled = jnp.dot(h2, bmask_t,
                         preferred_element_type=jnp.float32) * inv_hw           # (C, tb)
        y = jnp.dot(wse_ref[...], pooled,
                    preferred_element_type=jnp.float32) + bse_ref[...]          # (2C, tb)
        maps = jnp.dot(y, bmask, preferred_element_type=jnp.float32)            # (2C, L)
        shift_map, scale_map = maps[:c, :], maps[c:, :]

        o_ref[...] = (x + h2 * scale_map + shift_map).astype(o_ref.dtype)

    return kernel


def residual_block_forward(x, folded):
    """x: (N, C, H, W); folded: output of fold_residual_block_params."""
    n, c, h, w = x.shape
    hw = h * w

    # Batch blocking. If H*W is lane-aligned we can split the batch across grid steps;
    # otherwise fall back to a single full-extent block (always BlockSpec-legal).
    if hw % 128 == 0:
        per_batch = c * hw * x.dtype.itemsize
        tb = max(1, min(n, _TILE_TARGET_BYTES // per_batch))
        if n >= 2:
            tb = min(tb, -(-n // 2))       # >=2 grid steps so both v7x TCs get work
    else:
        tb = n
    n_pad = -(-n // tb) * tb
    grid = (n_pad // tb,)
    L = tb * hw

    # Channels-major, lane-dense layout (C, Npad*H*W); pad batch up to a multiple of TB.
    xr = jnp.transpose(x, (1, 0, 2, 3)).reshape(c, n, hw)
    if n_pad != n:
        xr = jnp.pad(xr, ((0, 0), (0, n_pad - n), (0, 0)))
    x2d = xr.reshape(c, n_pad * hw)

    # Static per-tap lane shifts; tap k = dy*3+dx reads source pixel offset s=(dy-1)*w+(dx-1).
    roll_like_jnp = _roll_is_like_jnp()
    shifts = []
    for dy in range(3):
        for dx in range(3):
            s = (dy - 1) * w + (dx - 1)
            shifts.append(((-s) % L) if roll_like_jnp else (s % L))

    kernel = _make_kernel(c, tb, h, w, tuple(int(s) for s in shifts))

    l_total = n_pad * hw
    flops = (2 * 2 * l_total * (9 * c) * c             # two stacked-tap convs
             + 2 * l_total * c * (2 * c + 1)           # SE pool + broadcast matmuls
             + 2 * n_pad * (2 * c) * c                 # SE linear
             + 6 * c * l_total)                        # masks, ReLU, residual/affine
    bytes_accessed = (2 * c * l_total                  # x in + out (the only big arrays)
                      + 2 * 9 * c * c + 2 * c * c + 6 * c) * x.dtype.itemsize

    out2d = pl.pallas_call(
        kernel,
        out_shape=jax.ShapeDtypeStruct((c, n_pad * hw), x.dtype),
        grid_spec=pltpu.PrefetchScalarGridSpec(
            num_scalar_prefetch=0,
            grid=grid,
            in_specs=[
                pl.BlockSpec((c, L), lambda i: (0, i)),           # x (batch block)
                pl.BlockSpec((c, 9 * c), lambda i: (0, 0)),       # conv1+BN1 stacked taps
                pl.BlockSpec((c, 1), lambda i: (0, 0)),           # conv1+BN1 bias
                pl.BlockSpec((c, 9 * c), lambda i: (0, 0)),       # conv2+BN2 stacked taps
                pl.BlockSpec((c, 1), lambda i: (0, 0)),           # conv2+BN2 bias
                pl.BlockSpec((2 * c, c), lambda i: (0, 0)),       # SE linear (shift|scale)
                pl.BlockSpec((2 * c, 1), lambda i: (0, 0)),       # SE bias
            ],
            out_specs=pl.BlockSpec((c, L), lambda i: (0, i)),
        ),
        compiler_params=pltpu.CompilerParams(
            dimension_semantics=("parallel",),
            vmem_limit_bytes=32 * 1024 * 1024,
        ),
        cost_estimate=pl.CostEstimate(flops=int(flops), transcendentals=0,
                                      bytes_accessed=int(bytes_accessed)),
    )(x2d, folded["w1"], folded["b1"], folded["w2"], folded["b2"],
      folded["w_se"], folded["b_se"])

    out = out2d.reshape(c, n_pad, hw)[:, :n, :]
    return jnp.transpose(out, (1, 0, 2)).reshape(n, c, h, w)


def residual_block_reference(x, p, eps=_BN_EPS):
    """Pure-JAX eval-mode reference for the PyTorch ResidualBlock."""
    def conv3x3(inp, w, b):
        out = jax.lax.conv_general_dilated(
            inp, w, window_strides=(1, 1), padding="SAME",
            dimension_numbers=("NCHW", "OIHW", "NCHW"),
            precision=jax.lax.Precision.HIGHEST)
        return out + b[None, :, None, None]

    def bn(inp, gamma, beta, mean, var):
        s = gamma * jax.lax.rsqrt(var + eps)
        return (s[None, :, None, None] * (inp - mean[None, :, None, None])
                + beta[None, :, None, None])

    h = jnp.maximum(bn(conv3x3(x, p["conv1_w"], p["conv1_b"]),
                       p["bn1_gamma"], p["bn1_beta"], p["bn1_mean"], p["bn1_var"]), 0.0)
    h = bn(conv3x3(h, p["conv2_w"], p["conv2_b"]),
           p["bn2_gamma"], p["bn2_beta"], p["bn2_mean"], p["bn2_var"])
    c = x.shape[1]
    pooled = jnp.mean(h, axis=(2, 3))
    y = pooled @ p["se_w"].T + p["se_b"]
    shift, scale = y[:, :c], y[:, c:]
    return x + h * scale[:, :, None, None] + shift[:, :, None, None]


if __name__ == "__main__":
    key = jax.random.PRNGKey(0)
    keys = jax.random.split(key, 16)
    N, C, H, W = 2, 4, 16, 16

    x = jax.random.normal(keys[0], (N, C, H, W), dtype=jnp.float32)
    params = dict(
        conv1_w=jax.random.normal(keys[1], (C, C, 3, 3), jnp.float32) * 0.2,
        conv1_b=jax.random.normal(keys[2], (C,), jnp.float32) * 0.1,
        bn1_gamma=1.0 + 0.1 * jax.random.normal(keys[3], (C,), jnp.float32),
        bn1_beta=0.1 * jax.random.normal(keys[4], (C,), jnp.float32),
        bn1_mean=0.1 * jax.random.normal(keys[5], (C,), jnp.float32),
        bn1_var=jax.random.uniform(keys[6], (C,), jnp.float32, 0.5, 1.5),
        conv2_w=jax.random.normal(keys[7], (C, C, 3, 3), jnp.float32) * 0.2,
        conv2_b=jax.random.normal(keys[8], (C,), jnp.float32) * 0.1,
        bn2_gamma=1.0 + 0.1 * jax.random.normal(keys[9], (C,), jnp.float32),
        bn2_beta=0.1 * jax.random.normal(keys[10], (C,), jnp.float32),
        bn2_mean=0.1 * jax.random.normal(keys[11], (C,), jnp.float32),
        bn2_var=jax.random.uniform(keys[12], (C,), jnp.float32, 0.5, 1.5),
        se_w=jax.random.normal(keys[13], (2 * C, C), jnp.float32) * 0.2,
        se_b=1.0 + 0.1 * jax.random.normal(keys[14], (2 * C,), jnp.float32),
    )

    folded = fold_residual_block_params(params)   # one-time, outside the hot path
    out = residual_block_forward(x, folded)
    out = jax.block_until_ready(out)

    ref = residual_block_reference(x, params)
    assert out.shape == (N, C, H, W)
    max_err = float(jnp.max(jnp.abs(out - ref)))
    # Tolerance sized to absorb a possible single-bf16-pass MXU lowering of the in-kernel
    # f32 dots under default precision; structural bugs (wrong tap/mask/segment/residual
    # wiring) produce O(0.1+) errors here because the SE biases/scales are ~1.0.
    assert max_err < 5e-2, f"mismatch vs reference: max abs err = {max_err}"

    print("KERNEL_OK")
</pallas_src>

<mosaic_0001>
module attributes {stable_mosaic.version = 11 : i64} {
  func.func @probe(%arg0: memref<8x128xf32, #tpu.memory_space<vmem>>, %arg1: memref<8x128xf32, #tpu.memory_space<vmem>>) attributes {dimension_semantics = [], scalar_prefetch = 0 : i64, scratch_operands = 0 : i64, tpu.core_type = #tpu.core_type<tc>} {
    %c0 = arith.constant 0 : index
    %c0_0 = arith.constant 0 : index
    %0 = vector.load %arg0[%c0, %c0_0] : memref<8x128xf32, #tpu.memory_space<vmem>>, vector<8x128xf32>
    %c1_i32 = arith.constant 1 : i32
    %1 = tpu.dynamic_rotate %0 by %c1_i32 dim 1 : vector<8x128xf32>, i32 -> vector<8x128xf32>
    %c0_1 = arith.constant 0 : index
    %c0_2 = arith.constant 0 : index
    %2 = vector.load %arg1[%c0_1, %c0_2] : memref<8x128xf32, #tpu.memory_space<vmem>>, vector<8x128xf32>
    tpu.vector_store %arg1[%c0_1, %c0_2], %1 {strides = array<i32>} : memref<8x128xf32, #tpu.memory_space<vmem>>, vector<8x128xf32>,
    return
  }
}

</mosaic_0001>

<llo_original>
// kernel: tpu_custom_call.1
$region0: #{tpu_custom_call.1}
  #allocation0 [shape = 'u32[]', space=smem, size = 0x4, offset = 0x4, fixed_abs, tag = 'smem constant byte address 0x4 - core index']
  #allocation1 [shape = 'u32[144,128]{1,0:T(1,128)}', space=vmem, size = 0x12000, scoped, tag = 'internal scratch']
  %s0 = inlined_call_operand.hbm [shape: f32[8,128], index: 0, kind: input, shape index: {}]
  %s1 = inlined_call_operand.hbm [shape: f32[8,128], index: 1, kind: output, shape index: {}]
  %s2 = sld [smem:[#allocation0]]
  $region18: #{tpu_custom_call.1} parent=0
    _
  %s4 = ssub.s32 1, %s2
  %s5 = scalar_select 0, %s4, %s2
  $region1: #{tpu_custom_call.1} parent=0
    #allocation2 [shape = 'u8[4096]{0}', space=vmem, size = 0x1000, scoped, tag = 'input window, operand 0, single buffered']
    #allocation3 [shape = 's32[1]{0}', space=sflag, size = 0x4, scoped, tag = 'scoped memory for tpu_custom_call.1']
    #allocation4 [shape = 's32[1]{0}', space=sflag, size = 0x4, scoped, tag = 'scoped memory for tpu_custom_call.1']
    #allocation5 [shape = 'u8[4096]{0}', space=vmem, size = 0x1000, scoped, tag = 'output window, operand 0, single buffered']
    %6 = vsyncpa [#allocation3], 0
    %7 = vsyncpa [#allocation4], 0
    // Predicated region
    $region2: #{tpu_custom_call.1} parent=1 // pred_check
      _
    $region3: #{tpu_custom_call.1} parent=1 // pred_check_branch
      %9 = sbr.rel (0) target = $region5
    $region4: #{tpu_custom_call.1} parent=1 // pred_region
      %s11 = ssub.s32 128, 128
      %12 = vsyncadd [#allocation3], %s11
      %s14 = sshll.u32 [#allocation2], 4
      %s15 = int_to_ptr.vmem [resolvable:$true] %s14
      %17 = dma.hbm_to_vmem [thread:$0]  %s0, 128, %s15, [#allocation3]
    $region5: #{tpu_custom_call.1} parent=1 // pred_fallthru
      _
    // Predicated region
    $region6: #{tpu_custom_call.1} parent=1 // pred_check
      _
    $region7: #{tpu_custom_call.1} parent=1 // pred_check_branch
      %19 = sbr.rel (0) target = $region9
    $region8: #{tpu_custom_call.1} parent=1 // pred_region
      %20 = dma.done [#allocation3], 128
    $region9: #{tpu_custom_call.1} parent=1 // pred_fallthru
      _
    %v21 = vld [vmem:[#allocation2] sm:$0xff]
    %22 = vrot.lane.b32.xlu0 %v21, 1
    %v23 = vpop.permute.xlu0 %22
    %24 = vst [vmem:[#allocation5] sm:$0xff] %v23
    // Predicated region
    $region10: #{tpu_custom_call.1} parent=1 // pred_check
      _
    $region11: #{tpu_custom_call.1} parent=1 // pred_check_branch
      %26 = sbr.rel (0) target = $region13
    $region12: #{tpu_custom_call.1} parent=1 // pred_region
      %s28 = ssub.s32 128, 128
      %29 = vsyncadd [#allocation4], %s28
      %s31 = sshll.u32 [#allocation5], 4
      %s32 = int_to_ptr.vmem [resolvable:$true] %s31
      %34 = dma.vmem_to_hbm [thread:$0]  %s32, 128, %s1, [#allocation4]
    $region13: #{tpu_custom_call.1} parent=1 // pred_fallthru
      _
    // Predicated region
    $region14: #{tpu_custom_call.1} parent=1 // pred_check
      _
    $region15: #{tpu_custom_call.1} parent=1 // pred_check_branch
      %36 = sbr.rel (0) target = $region17
    $region16: #{tpu_custom_call.1} parent=1 // pred_region
      %37 = dma.done [#allocation4], 128
    $region17: #{tpu_custom_call.1} parent=1 // pred_fallthru
      _
    %38 = vsyncpa [#allocation3], 1
    %39 = vsyncpa [#allocation4], 1

</llo_original>
